<compile_context>
chip_gen: v5e
topology: v5e:2x2
jax: 0.10.0
libtpu: 0.0.40
codegen_flags: <defaults>
</compile_context>

<pallas_src>
import functools

import numpy as np
import jax
import jax.numpy as jnp
from jax.experimental import pallas as pl
from jax.experimental.pallas import tpu as pltpu


# ----------------------------- Pallas kernels ------------------------------ #

def _opn_mat_kernel(x_ref, k_ref, out_ref, *, num_fields, embed_dim):
    """kernel_type == 'mat'.

    x_ref:   (F, E, Bt)   -- batch tile (multiple of 128) on the lane axis
    k_ref:   (NI*E, E)    -- k[(n*E + f), e] = kernel[f, n, e], pairs grouped
                             by left field (VMEM-resident, constant block)
    out_ref: (NI, Bt)     -- lane-dense output block
    """
    F, E = num_fields, embed_dim
    bt = x_ref.shape[2]
    off = 0
    for i in range(F - 1):                       # static loop: O(F) ops
        n_i = F - 1 - i
        x_i = x_ref[i]                           # (E, Bt) view load
        k_i = k_ref[off * E:(off + n_i) * E, :]  # (n_i*E, E) sublane slice
        # kp[(n_local*E + f), b] = sum_e kernel[f, off+n_local, e] * x[i, e, b]
        # -> plain 2-D MXU matmul with Bt (>=128) on the N dimension, f32 acc.
        kp = jax.lax.dot_general(
            k_i, x_i,
            dimension_numbers=(((1,), (0,)), ((), ())),
            preferred_element_type=jnp.float32)          # (n_i*E, Bt)
        kp = kp.reshape(n_i, E, bt)                      # free sublane split
        q_i = x_ref[i + 1:i + 1 + n_i]                   # (n_i, E, Bt) view load
        # out[n, b] = sum_f kp[n, f, b] * x[col(n), f, b]  (sublane reduce)
        out_ref[off:off + n_i, :] = jnp.sum(
            kp * q_i, axis=1, dtype=jnp.float32).astype(out_ref.dtype)
        off += n_i


def _opn_vec_kernel(x_ref, w_ref, out_ref, *, num_fields):
    """kernel_type in ('vec', 'num'): out[n, b] = sum_e x[i,e,b]*x[j,e,b]*w[n,e].

    x_ref:   (F, E, Bt)
    w_ref:   (NI, E) for 'vec', (NI, 1) for 'num'
    out_ref: (NI, Bt)
    """
    F = num_fields
    # One tiny relayout per grid step so the weight broadcasts along the lane
    # (batch) axis; avoids any per-field transposes of w.
    w3 = w_ref[...][:, :, None]                  # (NI, E, 1) or (NI, 1, 1)
    off = 0
    for i in range(F - 1):                       # static loop: O(F) ops
        n_i = F - 1 - i
        p = x_ref[i]                             # (E, Bt) view load
        q = x_ref[i + 1:i + 1 + n_i]             # (n_i, E, Bt) view load
        w_i = w3[off:off + n_i]
        out_ref[off:off + n_i, :] = jnp.sum(
            p[None, :, :] * q * w_i, axis=1, dtype=jnp.float32
        ).astype(out_ref.dtype)
        off += n_i


# ------------------------------ JAX wrapper -------------------------------- #

def _round_up(n, m):
    return ((n + m - 1) // m) * m


def _vmem_limit_bytes():
    """Scoped VMEM limit with headroom below physical capacity.

    v5e/v6e (128 MiB physical) -> 64 MiB; v7x (64 MiB physical) -> 48 MiB.
    """
    try:
        cap = int(pltpu.get_tpu_info().vmem_capacity_bytes)
    except Exception:
        cap = 128 * 1024 * 1024
    return int(min(64 * 1024 * 1024, (cap * 3) // 4))


def outer_product_network(x, kernel, kernel_type="mat", *, b_tile=512,
                          compute_dtype=None):
    """Forward pass of OuterProductNetwork.

    x:      (B, num_fields, E)
    kernel: 'mat' -> (E, NI, E), 'vec' -> (NI, E), 'num' -> (NI, 1)
    returns (B, NI), NI = num_fields * (num_fields - 1) // 2

    b_tile:        batch rows per grid step (rounded to a multiple of 128).
    compute_dtype: cast x / kernel before the kernel (e.g. jnp.bfloat16 on
                   v6e/v7x for ~2x HBM + MXU throughput); accumulation is f32.
    """
    B, F, E = x.shape
    if F < 2:
        raise ValueError("num_fields must be >= 2")
    NI = F * (F - 1) // 2
    out_dtype = x.dtype

    if compute_dtype is not None:
        x = x.astype(compute_dtype)
        kernel = kernel.astype(compute_dtype)

    # Batch tile = multiple of 128 -> every tile is lane-dense.
    b_tile = max(128, min(_round_up(b_tile, 128), _round_up(B, 128)))
    b_pad = _round_up(B, b_tile)

    # One XLA transpose in HBM: (B, F, E) -> (F, E, B); batch on the lane axis.
    xt = jnp.transpose(x, (1, 2, 0))
    if b_pad != B:
        xt = jnp.pad(xt, ((0, 0), (0, 0), (0, b_pad - B)))

    if kernel_type == "mat":
        # (E_out, NI, E_in) -> (NI*E_out, E_in), grouped by pair / left field,
        # so per-field weight blocks are free static sublane slices in-kernel.
        k = jnp.transpose(kernel, (1, 0, 2)).reshape(NI * E, E)
        body = functools.partial(_opn_mat_kernel, num_fields=F, embed_dim=E)
        k_spec = pl.BlockSpec((NI * E, E), lambda b: (0, 0))
        flops = b_pad * NI * (2 * E * E + 2 * E)
    elif kernel_type in ("vec", "num"):
        k = kernel                                  # (NI, E) or (NI, 1)
        body = functools.partial(_opn_vec_kernel, num_fields=F)
        k_spec = pl.BlockSpec((NI, k.shape[-1]), lambda b: (0, 0))
        flops = 3 * b_pad * NI * E
    else:
        raise ValueError("unknown kernel type: " + kernel_type)

    bytes_accessed = (xt.size * xt.dtype.itemsize
                      + k.size * k.dtype.itemsize
                      + NI * b_pad * jnp.dtype(out_dtype).itemsize)

    out_t = pl.pallas_call(
        body,
        out_shape=jax.ShapeDtypeStruct((NI, b_pad), out_dtype),
        grid=(b_pad // b_tile,),
        in_specs=[
            # NOTE: on v5e/v6e (128 MiB VMEM) pipeline_mode=pl.Buffered(3) on
            # this spec is a further option for the mem-bound vec/num path.
            pl.BlockSpec((F, E, b_tile), lambda b: (0, 0, b)),
            k_spec,   # constant index_map: kernel tensor stays VMEM-resident
        ],
        out_specs=pl.BlockSpec((NI, b_tile), lambda b: (0, b)),
        compiler_params=pltpu.CompilerParams(
            dimension_semantics=("parallel",),
            vmem_limit_bytes=_vmem_limit_bytes(),
        ),
        cost_estimate=pl.CostEstimate(
            flops=int(flops), transcendentals=0,
            bytes_accessed=int(bytes_accessed)),
    )(xt, k)

    # (NI, b_pad) -> (B, NI); drop batch padding. Output is small, cheap.
    return out_t[:, :B].T.astype(out_dtype)


# ----------------------- deterministic parameter init ---------------------- #

def xavier_uniform(key, shape, dtype=jnp.float32):
    """Matches torch.nn.init.xavier_uniform_ fan computation."""
    receptive = int(np.prod(shape[2:])) if len(shape) > 2 else 1
    fan_in = shape[1] * receptive
    fan_out = shape[0] * receptive
    bound = float(np.sqrt(6.0 / (fan_in + fan_out)))
    return jax.random.uniform(key, shape, dtype=dtype, minval=-bound, maxval=bound)


# ------------------------------ pure-JAX ref -------------------------------- #

def reference_forward(x, kernel, kernel_type="mat"):
    F = x.shape[1]
    pairs = [(i, j) for i in range(F - 1) for j in range(i + 1, F)]
    row = jnp.asarray([i for i, _ in pairs], dtype=jnp.int32)
    col = jnp.asarray([j for _, j in pairs], dtype=jnp.int32)
    p = x[:, row]
    q = x[:, col]
    if kernel_type == "mat":
        kp = jnp.sum(p[:, None, :, :] * kernel[None, :, :, :], axis=-1)  # (B, E, NI)
        kp = jnp.transpose(kp, (0, 2, 1))                                # (B, NI, E)
        return jnp.sum(kp * q, axis=-1)
    else:
        return jnp.sum(p * q * kernel[None], axis=-1)


# ---------------------------------- main ------------------------------------ #

if __name__ == "__main__":
    B, F, E = 2, 4, 32
    NI = F * (F - 1) // 2

    key = jax.random.PRNGKey(0)
    kx, km, kv, kn = jax.random.split(key, 4)

    x = jax.random.normal(kx, (B, F, E), dtype=jnp.float32)
    kernel_mat = xavier_uniform(km, (E, NI, E))
    kernel_vec = xavier_uniform(kv, (NI, E))
    kernel_num = xavier_uniform(kn, (NI, 1))

    ok = True
    for ktype, kern in (("mat", kernel_mat), ("vec", kernel_vec), ("num", kernel_num)):
        out = jax.block_until_ready(outer_product_network(x, kern, kernel_type=ktype))
        ref = jax.block_until_ready(reference_forward(x, kern, kernel_type=ktype))
        if out.shape != (B, NI):
            ok = False
        # tolerance leaves headroom for MXU f32 multi-pass rounding in 'mat'
        if not np.allclose(np.asarray(out), np.asarray(ref), rtol=1e-3, atol=1e-3):
            ok = False

    if ok:
        print("KERNEL_OK")
</pallas_src>

<mosaic_0001>
module attributes {stable_mosaic.version = 11 : i64} {
  func.func @_opn_mat_kernel(%arg0: i32, %arg1: memref<4x32x128xf32, #tpu.memory_space<vmem>>, %arg2: memref<192x32xf32, #tpu.memory_space<vmem>>, %arg3: memref<6x128xf32, #tpu.memory_space<vmem>>) attributes {dimension_semantics = [#tpu.dimension_semantics<parallel>], iteration_bounds = array<i64: 1>, scalar_prefetch = 0 : i64, scratch_operands = 0 : i64, tpu.core_type = #tpu.core_type<tc>, window_params = [{transform_indices = @transform_0, window_bounds = array<i64: 4, 32, 128>}, {pipeline_mode = #tpu.pipeline_mode<synchronous>, transform_indices = @transform_1, window_bounds = array<i64: 192, 32>}, {transform_indices = @transform_2, window_bounds = array<i64: 6, 128>}]} {
    %c0 = arith.constant 0 : index
    %c0_0 = arith.constant 0 : index
    %c0_1 = arith.constant 0 : index
    %0 = vector.load %arg1[%c0, %c0_0, %c0_1] : memref<4x32x128xf32, #tpu.memory_space<vmem>>, vector<1x32x128xf32>
    %1 = vector.shape_cast %0 : vector<1x32x128xf32> to vector<32x128xf32>
    %c0_2 = arith.constant 0 : index
    %c0_3 = arith.constant 0 : index
    %2 = vector.load %arg2[%c0_2, %c0_3] : memref<192x32xf32, #tpu.memory_space<vmem>>, vector<96x32xf32>
    %cst = arith.constant dense<0.000000e+00> : vector<96x128xf32>
    %3 = tpu.matmul %2, %1, %cst {dimension_numbers = #tpu.dot_dimension_numbers<[1], [0], [0], [1], [0, 0, 1, 1], [], []>} : vector<96x32xf32>, vector<32x128xf32>, vector<96x128xf32> -> vector<96x128xf32>
    %4 = vector.shape_cast %3 : vector<96x128xf32> to vector<3x32x128xf32>
    %c1 = arith.constant 1 : index
    %c0_4 = arith.constant 0 : index
    %c0_5 = arith.constant 0 : index
    %5 = vector.load %arg1[%c1, %c0_4, %c0_5] : memref<4x32x128xf32, #tpu.memory_space<vmem>>, vector<3x32x128xf32>
    %6 = arith.mulf %4, %5 : vector<3x32x128xf32>
    %cst_6 = arith.constant dense<0.000000e+00> : vector<3x128xf32>
    %7 = vector.multi_reduction <add>, %6, %cst_6 [1] : vector<3x32x128xf32> to vector<3x128xf32>
    %c0_7 = arith.constant 0 : index
    %c0_8 = arith.constant 0 : index
    %8 = vector.load %arg3[%c0_7, %c0_8] : memref<6x128xf32, #tpu.memory_space<vmem>>, vector<3x128xf32>
    tpu.vector_store %arg3[%c0_7, %c0_8], %7 {strides = array<i32>} : memref<6x128xf32, #tpu.memory_space<vmem>>, vector<3x128xf32>,
    %c1_9 = arith.constant 1 : index
    %c0_10 = arith.constant 0 : index
    %c0_11 = arith.constant 0 : index
    %9 = vector.load %arg1[%c1_9, %c0_10, %c0_11] : memref<4x32x128xf32, #tpu.memory_space<vmem>>, vector<1x32x128xf32>
    %10 = vector.shape_cast %9 : vector<1x32x128xf32> to vector<32x128xf32>
    %c96 = arith.constant 96 : index
    %c0_12 = arith.constant 0 : index
    %11 = vector.load %arg2[%c96, %c0_12] : memref<192x32xf32, #tpu.memory_space<vmem>>, vector<64x32xf32>
    %cst_13 = arith.constant dense<0.000000e+00> : vector<64x128xf32>
    %12 = tpu.matmul %11, %10, %cst_13 {dimension_numbers = #tpu.dot_dimension_numbers<[1], [0], [0], [1], [0, 0, 1, 1], [], []>} : vector<64x32xf32>, vector<32x128xf32>, vector<64x128xf32> -> vector<64x128xf32>
    %13 = vector.shape_cast %12 : vector<64x128xf32> to vector<2x32x128xf32>
    %c2 = arith.constant 2 : index
    %c0_14 = arith.constant 0 : index
    %c0_15 = arith.constant 0 : index
    %14 = vector.load %arg1[%c2, %c0_14, %c0_15] : memref<4x32x128xf32, #tpu.memory_space<vmem>>, vector<2x32x128xf32>
    %15 = arith.mulf %13, %14 : vector<2x32x128xf32>
    %cst_16 = arith.constant dense<0.000000e+00> : vector<2x128xf32>
    %16 = vector.multi_reduction <add>, %15, %cst_16 [1] : vector<2x32x128xf32> to vector<2x128xf32>
    %c3 = arith.constant 3 : index
    %c0_17 = arith.constant 0 : index
    %17 = vector.load %arg3[%c3, %c0_17] : memref<6x128xf32, #tpu.memory_space<vmem>>, vector<2x128xf32>
    tpu.vector_store %arg3[%c3, %c0_17], %16 {strides = array<i32>} : memref<6x128xf32, #tpu.memory_space<vmem>>, vector<2x128xf32>,
    %c2_18 = arith.constant 2 : index
    %c0_19 = arith.constant 0 : index
    %c0_20 = arith.constant 0 : index
    %18 = vector.load %arg1[%c2_18, %c0_19, %c0_20] : memref<4x32x128xf32, #tpu.memory_space<vmem>>, vector<1x32x128xf32>
    %19 = vector.shape_cast %18 : vector<1x32x128xf32> to vector<32x128xf32>
    %c160 = arith.constant 160 : index
    %c0_21 = arith.constant 0 : index
    %20 = vector.load %arg2[%c160, %c0_21] : memref<192x32xf32, #tpu.memory_space<vmem>>, vector<32x32xf32>
    %cst_22 = arith.constant dense<0.000000e+00> : vector<32x128xf32>
    %21 = tpu.matmul %20, %19, %cst_22 {dimension_numbers = #tpu.dot_dimension_numbers<[1], [0], [0], [1], [0, 0, 1, 1], [], []>} : vector<32x32xf32>, vector<32x128xf32>, vector<32x128xf32> -> vector<32x128xf32>
    %22 = vector.shape_cast %21 : vector<32x128xf32> to vector<1x32x128xf32>
    %c3_23 = arith.constant 3 : index
    %c0_24 = arith.constant 0 : index
    %c0_25 = arith.constant 0 : index
    %23 = vector.load %arg1[%c3_23, %c0_24, %c0_25] : memref<4x32x128xf32, #tpu.memory_space<vmem>>, vector<1x32x128xf32>
    %24 = arith.mulf %22, %23 : vector<1x32x128xf32>
    %cst_26 = arith.constant dense<0.000000e+00> : vector<1x128xf32>
    %25 = vector.multi_reduction <add>, %24, %cst_26 [1] : vector<1x32x128xf32> to vector<1x128xf32>
    %c5 = arith.constant 5 : index
    %c0_27 = arith.constant 0 : index
    %26 = vector.load %arg3[%c5, %c0_27] : memref<6x128xf32, #tpu.memory_space<vmem>>, vector<1x128xf32>
    tpu.vector_store %arg3[%c5, %c0_27], %25 {strides = array<i32>} : memref<6x128xf32, #tpu.memory_space<vmem>>, vector<1x128xf32>,
    return
  }
  func.func @transform_0(%arg0: i32) -> (i32, i32, i32) {
    %c0_i32 = arith.constant 0 : i32
    %c0_i32_0 = arith.constant 0 : i32
    %c0_i32_1 = arith.constant 0 : i32
    return %c0_i32, %c0_i32_0, %arg0 : i32, i32, i32
  }
  func.func @transform_1(%arg0: i32) -> (i32, i32) {
    %c0_i32 = arith.constant 0 : i32
    %c0_i32_0 = arith.constant 0 : i32
    %c0_i32_1 = arith.constant 0 : i32
    return %c0_i32, %c0_i32_0 : i32, i32
  }
  func.func @transform_2(%arg0: i32) -> (i32, i32) {
    %c0_i32 = arith.constant 0 : i32
    %c0_i32_0 = arith.constant 0 : i32
    return %c0_i32, %arg0 : i32, i32
  }
}

</mosaic_0001>

<llo_original>
// kernel: tpu_custom_call.1
$region0: #{tpu_custom_call.1}
  #allocation0 [shape = 'u32[]', space=smem, size = 0x4, offset = 0x4, fixed_abs, tag = 'smem constant byte address 0x4 - core index']
  #allocation1 [shape = 'u32[72,128]{1,0:T(1,128)}', space=vmem, size = 0x9000, scoped, tag = 'internal scratch']
  %s0 = inlined_call_operand.vmem [shape: f32[4,32,128], index: 0, kind: input, shape index: {}]
  %s1 = inlined_call_operand.vmem [shape: f32[192,32], index: 1, kind: input, shape index: {}]
  %s2 = inlined_call_operand.hbm [shape: f32[6,128], index: 2, kind: output, shape index: {}]
  %s3 = sld [smem:[#allocation0]]
  $region18: #{tpu_custom_call.1} parent=0
    _
  %s5 = ssub.s32 1, %s3
  %s6 = scalar_select 0, %s5, %s3
  $region1: #{tpu_custom_call.1} parent=0
    #allocation2 [shape = 'u8[4096]{0}', space=vmem, size = 0x1000, scoped, tag = 'output window, operand 0, single buffered']
    #allocation3 [shape = 's32[1]{0}', space=sflag, size = 0x4, scoped, tag = 'scoped memory for tpu_custom_call.1']
    %7 = vsyncpa [#allocation3], 0
    // Predicated region
    $region2: #{tpu_custom_call.1} parent=1 // pred_check
      _
    $region3: #{tpu_custom_call.1} parent=1 // pred_check_branch
      %9 = sbr.rel (0) target = $region5
    $region4: #{tpu_custom_call.1} parent=1 // pred_region
      _
    $region5: #{tpu_custom_call.1} parent=1 // pred_fallthru
      _
    // Predicated region
    $region6: #{tpu_custom_call.1} parent=1 // pred_check
      _
    $region7: #{tpu_custom_call.1} parent=1 // pred_check_branch
      %11 = sbr.rel (0) target = $region9
    $region8: #{tpu_custom_call.1} parent=1 // pred_region
      _
    $region9: #{tpu_custom_call.1} parent=1 // pred_fallthru
      _
    %v12 = vld [vmem:[%s0] sm:$0xff]
    %v13 = vld [vmem:[%s0 + $0x8] sm:$0xff]
    %v14 = vld [vmem:[%s0 + $0x10] sm:$0xff]
    %v15 = vld [vmem:[%s0 + $0x18] sm:$0xff]
    %v16 = vld [vmem:[%s1] sm:$0xff]
    %v17 = vld [vmem:[%s1 + $0x8] sm:$0xff]
    %v18 = vld [vmem:[%s1 + $0x10] sm:$0xff]
    %v19 = vld [vmem:[%s1 + $0x18] sm:$0xff]
    %v20 = vld [vmem:[%s1 + $0x20] sm:$0xff]
    %v21 = vld [vmem:[%s1 + $0x28] sm:$0xff]
    %v22 = vld [vmem:[%s1 + $0x30] sm:$0xff]
    %v23 = vld [vmem:[%s1 + $0x38] sm:$0xff]
    %v24 = vld [vmem:[%s1 + $0x40] sm:$0xff]
    %v25 = vld [vmem:[%s1 + $0x48] sm:$0xff]
    %v26 = vld [vmem:[%s1 + $0x50] sm:$0xff]
    %v27 = vld [vmem:[%s1 + $0x58] sm:$0xff]
    %vm28 = vcmask 261120
    %v30 = vsel %vm28, %v16, 0
    %v33 = vsel %vm28, %v17, 0
    %v36 = vsel %vm28, %v18, 0
    %v39 = vsel %vm28, %v19, 0
    %v42 = vsel %vm28, %v20, 0
    %v45 = vsel %vm28, %v21, 0
    %v48 = vsel %vm28, %v22, 0
    %v51 = vsel %vm28, %v23, 0
    %v54 = vsel %vm28, %v24, 0
    %v57 = vsel %vm28, %v25, 0
    %v60 = vsel %vm28, %v26, 0
    %v63 = vsel %vm28, %v27, 0
    %65 = vmatpush.msra.mxu0 0.0
    %66 = vmatpush.msra.mxu0 0.0
    %67 = vmatpush.msra.mxu0 0.0
    %68 = vmatpush.msra.mxu0 0.0
    %69 = vmatpush.msra.mxu0 0.0
    %70 = vmatpush.msra.mxu0 0.0
    %71 = vmatpush.msra.mxu0 0.0
    %72 = vmatpush.msra.mxu0 0.0
    %73 = vmatpush.msra.mxu0 0.0
    %74 = vmatpush.msra.mxu0 0.0
    %75 = vmatpush.msra.mxu0 0.0
    %76 = vmatpush.msra.mxu0 0.0
    %77 = vmatpush.msra.mxu0 %v15
    %78 = vmatpush.msra.mxu0 %v14
    %79 = vmatpush.msra.mxu0 %v13
    %80 = vmatpush.msra.mxu0 %v12
    %81 = vmatmul.f32.gmra.mxu0 %v30
    %v82 = vpop.f32.mrf.mxu0
    %v83 = vadd.f32 0.0, %v82
    %84 = vmatmul.f32.gmra.mxu0 %v33
    %v85 = vpop.f32.mrf.mxu0
    %v86 = vadd.f32 0.0, %v85
    %87 = vmatmul.f32.gmra.mxu0 %v36
    %v88 = vpop.f32.mrf.mxu0
    %v89 = vadd.f32 0.0, %v88
    %90 = vmatmul.f32.gmra.mxu0 %v39
    %v91 = vpop.f32.mrf.mxu0
    %v92 = vadd.f32 0.0, %v91
    %93 = vmatmul.f32.gmra.mxu0 %v42
    %v94 = vpop.f32.mrf.mxu0
    %v95 = vadd.f32 0.0, %v94
    %96 = vmatmul.f32.gmra.mxu0 %v45
    %v97 = vpop.f32.mrf.mxu0
    %v98 = vadd.f32 0.0, %v97
    %99 = vmatmul.f32.gmra.mxu0 %v48
    %v100 = vpop.f32.mrf.mxu0
    %v101 = vadd.f32 0.0, %v100
    %102 = vmatmul.f32.gmra.mxu0 %v51
    %v103 = vpop.f32.mrf.mxu0
    %v104 = vadd.f32 0.0, %v103
    %105 = vmatmul.f32.gmra.mxu0 %v54
    %v106 = vpop.f32.mrf.mxu0
    %v107 = vadd.f32 0.0, %v106
    %108 = vmatmul.f32.gmra.mxu0 %v57
    %v109 = vpop.f32.mrf.mxu0
    %v110 = vadd.f32 0.0, %v109
    %111 = vmatmul.f32.gmra.mxu0 %v60
    %v112 = vpop.f32.mrf.mxu0
    %v113 = vadd.f32 0.0, %v112
    %114 = vmatmul.f32.gmra.mxu0 %v63
    %v115 = vpop.f32.mrf.mxu0
    %v116 = vadd.f32 0.0, %v115
    %117 = vdwg.mxu0
    %s118 = scalar_lea.vmem %s0, 32
    %v119 = vld [vmem:[%s118] sm:$0xff]
    %v120 = vld [vmem:[%s118 + $0x8] sm:$0xff]
    %v121 = vld [vmem:[%s118 + $0x10] sm:$0xff]
    %v122 = vld [vmem:[%s118 + $0x18] sm:$0xff]
    %v123 = vld [vmem:[%s118 + $0x20] sm:$0xff]
    %v124 = vld [vmem:[%s118 + $0x28] sm:$0xff]
    %v125 = vld [vmem:[%s118 + $0x30] sm:$0xff]
    %v126 = vld [vmem:[%s118 + $0x38] sm:$0xff]
    %v127 = vld [vmem:[%s118 + $0x40] sm:$0xff]
    %v128 = vld [vmem:[%s118 + $0x48] sm:$0xff]
    %v129 = vld [vmem:[%s118 + $0x50] sm:$0xff]
    %v130 = vld [vmem:[%s118 + $0x58] sm:$0xff]
    %v131 = vmul.f32 %v83, %v119
    %v132 = vmul.f32 %v86, %v120
    %v133 = vmul.f32 %v89, %v121
    %v134 = vmul.f32 %v92, %v122
    %v135 = vmul.f32 %v95, %v123
    %v136 = vmul.f32 %v98, %v124
    %v137 = vmul.f32 %v101, %v125
    %v138 = vmul.f32 %v104, %v126
    %v139 = vmul.f32 %v107, %v127
    %v140 = vmul.f32 %v110, %v128
    %v141 = vmul.f32 %v113, %v129
    %v142 = vmul.f32 %v116, %v130
    %v143 = vadd.f32 %v131, %v132
    %v144 = vadd.f32 %v143, %v133
    %v145 = vadd.f32 %v144, %v134
    %v146 = vrot.slane %v145, 4
    %v147 = vadd.f32 %v145, %v146
    %v148 = vrot.slane %v147, 2
    %v149 = vadd.f32 %v147, %v148
    %v150 = vrot.slane %v149, 1
    %v151 = vadd.f32 %v149, %v150
    %v152 = vadd.f32 %v135, %v136
    %v153 = vadd.f32 %v152, %v137
    %v154 = vadd.f32 %v153, %v138
    %v155 = vrot.slane %v154, 4
    %v156 = vadd.f32 %v154, %v155
    %v157 = vrot.slane %v156, 2
    %v158 = vadd.f32 %v156, %v157
    %v159 = vrot.slane %v158, 1
    %v160 = vadd.f32 %v158, %v159
    %v161 = vadd.f32 %v139, %v140
    %v162 = vadd.f32 %v161, %v141
    %v163 = vadd.f32 %v162, %v142
    %v164 = vrot.slane %v163, 4
    %v165 = vadd.f32 %v163, %v164
    %v166 = vrot.slane %v165, 2
    %v167 = vadd.f32 %v165, %v166
    %v168 = vrot.slane %v167, 1
    %v169 = vadd.f32 %v167, %v168
    %vm173 = vcmask 1041409
    %v174 = vsel %vm173, %v160, %v151
    %vm175 = vcmask 1042434
    %v176 = vsel %vm175, %v169, %v174
    %178 = vst [vmem:[#allocation2] sm:$0x7] %v176
    %v179 = vld [vmem:[%s118] sm:$0xff]
    %v180 = vld [vmem:[%s118 + $0x8] sm:$0xff]
    %v181 = vld [vmem:[%s118 + $0x10] sm:$0xff]
    %v182 = vld [vmem:[%s118 + $0x18] sm:$0xff]
    %v183 = vld [vmem:[%s1 + $0x60] sm:$0xff]
    %v184 = vld [vmem:[%s1 + $0x68] sm:$0xff]
    %v185 = vld [vmem:[%s1 + $0x70] sm:$0xff]
    %v186 = vld [vmem:[%s1 + $0x78] sm:$0xff]
    %v187 = vld [vmem:[%s1 + $0x80] sm:$0xff]
    %v188 = vld [vmem:[%s1 + $0x88] sm:$0xff]
    %v189 = vld [vmem:[%s1 + $0x90] sm:$0xff]
    %v190 = vld [vmem:[%s1 + $0x98] sm:$0xff]
    %v192 = vsel %vm28, %v183, 0
    %v195 = vsel %vm28, %v184, 0
    %v198 = vsel %vm28, %v185, 0
    %v201 = vsel %vm28, %v186, 0
    %v204 = vsel %vm28, %v187, 0
    %v207 = vsel %vm28, %v188, 0
    %v210 = vsel %vm28, %v189, 0
    %v213 = vsel %vm28, %v190, 0
    %215 = vmatpush.msra.mxu0 0.0
    %216 = vmatpush.msra.mxu0 0.0
    %217 = vmatpush.msra.mxu0 0.0
    %218 = vmatpush.msra.mxu0 0.0
    %219 = vmatpush.msra.mxu0 0.0
    %220 = vmatpush.msra.mxu0 0.0
    %221 = vmatpush.msra.mxu0 0.0
    %222 = vmatpush.msra.mxu0 0.0
    %223 = vmatpush.msra.mxu0 0.0
    %224 = vmatpush.msra.mxu0 0.0
    %225 = vmatpush.msra.mxu0 0.0
    %226 = vmatpush.msra.mxu0 0.0
    %227 = vmatpush.msra.mxu0 %v182
    %228 = vmatpush.msra.mxu0 %v181
    %229 = vmatpush.msra.mxu0 %v180
    %230 = vmatpush.msra.mxu0 %v179
    %231 = vmatmul.f32.gmra.mxu0 %v192
    %v232 = vpop.f32.mrf.mxu0
    %v233 = vadd.f32 0.0, %v232
    %234 = vmatmul.f32.gmra.mxu0 %v195
    %v235 = vpop.f32.mrf.mxu0
    %v236 = vadd.f32 0.0, %v235
    %237 = vmatmul.f32.gmra.mxu0 %v198
    %v238 = vpop.f32.mrf.mxu0
    %v239 = vadd.f32 0.0, %v238
    %240 = vmatmul.f32.gmra.mxu0 %v201
    %v241 = vpop.f32.mrf.mxu0
    %v242 = vadd.f32 0.0, %v241
    %243 = vmatmul.f32.gmra.mxu0 %v204
    %v244 = vpop.f32.mrf.mxu0
    %v245 = vadd.f32 0.0, %v244
    %246 = vmatmul.f32.gmra.mxu0 %v207
    %v247 = vpop.f32.mrf.mxu0
    %v248 = vadd.f32 0.0, %v247
    %249 = vmatmul.f32.gmra.mxu0 %v210
    %v250 = vpop.f32.mrf.mxu0
    %v251 = vadd.f32 0.0, %v250
    %252 = vmatmul.f32.gmra.mxu0 %v213
    %v253 = vpop.f32.mrf.mxu0
    %v254 = vadd.f32 0.0, %v253
    %255 = vdwg.mxu0
    %s256 = scalar_lea.vmem %s0, 64
    %v257 = vld [vmem:[%s256] sm:$0xff]
    %v258 = vld [vmem:[%s256 + $0x8] sm:$0xff]
    %v259 = vld [vmem:[%s256 + $0x10] sm:$0xff]
    %v260 = vld [vmem:[%s256 + $0x18] sm:$0xff]
    %v261 = vld [vmem:[%s256 + $0x20] sm:$0xff]
    %v262 = vld [vmem:[%s256 + $0x28] sm:$0xff]
    %v263 = vld [vmem:[%s256 + $0x30] sm:$0xff]
    %v264 = vld [vmem:[%s256 + $0x38] sm:$0xff]
    %v265 = vmul.f32 %v233, %v257
    %v266 = vmul.f32 %v236, %v258
    %v267 = vmul.f32 %v239, %v259
    %v268 = vmul.f32 %v242, %v260
    %v269 = vmul.f32 %v245, %v261
    %v270 = vmul.f32 %v248, %v262
    %v271 = vmul.f32 %v251, %v263
    %v272 = vmul.f32 %v254, %v264
    %v273 = vadd.f32 %v265, %v266
    %v274 = vadd.f32 %v273, %v267
    %v275 = vadd.f32 %v274, %v268
    %v276 = vrot.slane %v275, 4
    %v277 = vadd.f32 %v275, %v276
    %v278 = vrot.slane %v277, 2
    %v279 = vadd.f32 %v277, %v278
    %v280 = vrot.slane %v279, 1
    %v281 = vadd.f32 %v279, %v280
    %v282 = vadd.f32 %v269, %v270
    %v283 = vadd.f32 %v282, %v271
    %v284 = vadd.f32 %v283, %v272
    %v285 = vrot.slane %v284, 4
    %v286 = vadd.f32 %v284, %v285
    %v287 = vrot.slane %v286, 2
    %v288 = vadd.f32 %v286, %v287
    %v289 = vrot.slane %v288, 1
    %v290 = vadd.f32 %v288, %v289
    %v293 = vsel %vm173, %v290, %v281
    %295 = vst [vmem:[#allocation2 + $0x3] sm:$0x3] %v293
    %v296 = vld [vmem:[%s256] sm:$0xff]
    %v297 = vld [vmem:[%s256 + $0x8] sm:$0xff]
    %v298 = vld [vmem:[%s256 + $0x10] sm:$0xff]
    %v299 = vld [vmem:[%s256 + $0x18] sm:$0xff]
    %v300 = vld [vmem:[%s1 + $0xa0] sm:$0xff]
    %v301 = vld [vmem:[%s1 + $0xa8] sm:$0xff]
    %v302 = vld [vmem:[%s1 + $0xb0] sm:$0xff]
    %v303 = vld [vmem:[%s1 + $0xb8] sm:$0xff]
    %v305 = vsel %vm28, %v300, 0
    %v308 = vsel %vm28, %v301, 0
    %v311 = vsel %vm28, %v302, 0
    %v314 = vsel %vm28, %v303, 0
    %316 = vmatpush.msra.mxu0 0.0
    %317 = vmatpush.msra.mxu0 0.0
    %318 = vmatpush.msra.mxu0 0.0
    %319 = vmatpush.msra.mxu0 0.0
    %320 = vmatpush.msra.mxu0 0.0
    %321 = vmatpush.msra.mxu0 0.0
    %322 = vmatpush.msra.mxu0 0.0
    %323 = vmatpush.msra.mxu0 0.0
    %324 = vmatpush.msra.mxu0 0.0
    %325 = vmatpush.msra.mxu0 0.0
    %326 = vmatpush.msra.mxu0 0.0
    %327 = vmatpush.msra.mxu0 0.0
    %328 = vmatpush.msra.mxu0 %v299
    %329 = vmatpush.msra.mxu0 %v298
    %330 = vmatpush.msra.mxu0 %v297
    %331 = vmatpush.msra.mxu0 %v296
    %332 = vmatmul.f32.gmra.mxu0 %v305
    %v333 = vpop.f32.mrf.mxu0
    %v334 = vadd.f32 0.0, %v333
    %335 = vmatmul.f32.gmra.mxu0 %v308
    %v336 = vpop.f32.mrf.mxu0
    %v337 = vadd.f32 0.0, %v336
    %338 = vmatmul.f32.gmra.mxu0 %v311
    %v339 = vpop.f32.mrf.mxu0
    %v340 = vadd.f32 0.0, %v339
    %341 = vmatmul.f32.gmra.mxu0 %v314
    %v342 = vpop.f32.mrf.mxu0
    %v343 = vadd.f32 0.0, %v342
    %344 = vdwg.mxu0
    %s345 = scalar_lea.vmem %s0, 96
    %v346 = vld [vmem:[%s345] sm:$0xff]
    %v347 = vld [vmem:[%s345 + $0x8] sm:$0xff]
    %v348 = vld [vmem:[%s345 + $0x10] sm:$0xff]
    %v349 = vld [vmem:[%s345 + $0x18] sm:$0xff]
    %v350 = vmul.f32 %v334, %v346
    %v351 = vmul.f32 %v337, %v347
    %v352 = vmul.f32 %v340, %v348
    %v353 = vmul.f32 %v343, %v349
    %v354 = vadd.f32 %v350, %v351
    %v355 = vadd.f32 %v354, %v352
    %v356 = vadd.f32 %v355, %v353
    %v357 = vrot.slane %v356, 4
    %v358 = vadd.f32 %v356, %v357
    %v359 = vrot.slane %v358, 2
    %v360 = vadd.f32 %v358, %v359
    %v361 = vrot.slane %v360, 1
    %v362 = vadd.f32 %v360, %v361
    %363 = vst [vmem:[#allocation2 + $0x5] sm:$0x1] %v362
    // Predicated region
    $region10: #{tpu_custom_call.1} parent=1 // pred_check
      _
    $region11: #{tpu_custom_call.1} parent=1 // pred_check_branch
      %365 = sbr.rel (0) target = $region13
    $region12: #{tpu_custom_call.1} parent=1 // pred_region
      %367 = vsyncadd [#allocation3], 0
      %s369 = sshll.u32 [#allocation2], 4
      %s370 = int_to_ptr.vmem [resolvable:$true] %s369
      %s371 = sshll.u32 %s2, 4
      %s372 = int_to_ptr.hbm [resolvable:$true] %s371
      %374 = dma.vmem_to_hbm [thread:$0]  %s370, 128, %s372, [#allocation3]
    $region13: #{tpu_custom_call.1} parent=1 // pred_fallthru
      _
    // Predicated region
    $region14: #{tpu_custom_call.1} parent=1 // pred_check
      _
    $region15: #{tpu_custom_call.1} parent=1 // pred_check_branch
      %376 = sbr.rel (0) target = $region17
    $region16: #{tpu_custom_call.1} parent=1 // pred_region
      %378 = dma.done [#allocation3], 128
    $region17: #{tpu_custom_call.1} parent=1 // pred_fallthru
      _
    %379 = vsyncpa [#allocation3], 1

</llo_original>
